<compile_context>
chip_gen: v6e
topology: v6e:2x2x1
jax: 0.10.0
libtpu: 0.0.40
codegen_flags: <defaults>
</compile_context>

<pallas_src>
import math
from functools import partial

import jax
import jax.numpy as jnp
from jax.experimental import pallas as pl
from jax.experimental.pallas import tpu as pltpu

LANE = 128           # TPU lane width (last-dim tiling)
SUBLANE_BF16 = 16    # bf16 packs 16 sublanes per vreg -> batch-tile granularity
_INV_SQRT2 = 1.0 / math.sqrt(2.0)


def _round_up(n: int, m: int) -> int:
    return ((n + m - 1) // m) * m


def _cdiv(a: int, b: int) -> int:
    return -(-a // b)


def _vmem_capacity_bytes() -> int:
    """Physical VMEM per TensorCore; conservative 64 MiB (v7x) fallback."""
    try:
        info = pltpu.get_tpu_info()
        for attr in ("vmem_capacity_bytes", "vmem_bytes"):
            cap = getattr(info, attr, None)
            if cap:
                return int(cap)
    except Exception:
        pass
    return 64 << 20


# ----------------------------------------------------------------------------
# Kernel: whole MLP fused. Weights/biases are VMEM-resident (single buffer)
# across the batch grid; activation tiles are pipelined per batch tile.
# ----------------------------------------------------------------------------
def _make_mlp_kernel(num_layers: int):
    def kernel(x_ref, *refs):
        # refs = (w0, b0, w1, b1, ..., w_{L-1}, b_{L-1}, out_ref)
        out_ref = refs[-1]
        h = x_ref[...]                                   # [tile_b, in_pad] bf16
        for layer in range(num_layers):
            w = refs[2 * layer][...]                     # [in_pad, out_pad] bf16
            b = refs[2 * layer + 1][...]                 # [1, out_pad]      f32
            # bf16 x bf16 on the MXU with f32 accumulation; bias add in f32.
            acc = jnp.dot(h, w, preferred_element_type=jnp.float32) + b
            if layer < num_layers - 1:
                # Exact (erf) GELU in f32 — matches torch.nn.GELU() default.
                # TODO(synk): switch to the tanh form (routes to the idle EUP
                # slot, essentially free) if approximate-GELU parity is signed off.
                acc = 0.5 * acc * (1.0 + jax.lax.erf(acc * _INV_SQRT2))
                h = acc.astype(jnp.bfloat16)             # bf16 MXU operand next layer
            else:
                out_ref[...] = acc.astype(out_ref.dtype)

    return kernel


# ----------------------------------------------------------------------------
# Parameter construction (PyTorch nn.Linear-style uniform init, pre-transposed
# to [in, out]) and packing (zero-pad to 128 lanes, weights -> bf16).
# ----------------------------------------------------------------------------
def init_embed_block_params(key, input_size: int, layer_sizes):
    sizes = [input_size] + list(layer_sizes)
    params = []
    for fan_in, fan_out in zip(sizes[:-1], sizes[1:]):
        key, kw, kb = jax.random.split(key, 3)
        bound = 1.0 / math.sqrt(fan_in)
        w = jax.random.uniform(kw, (fan_in, fan_out), jnp.float32, -bound, bound)
        b = jax.random.uniform(kb, (fan_out,), jnp.float32, -bound, bound)
        params.append((w, b))
    return params


def pack_embed_block_params(params):
    """Zero-pad every feature dim to a multiple of 128 lanes; weights -> bf16,
    biases stay f32. Zero-padded weight rows/cols keep the real outputs exact
    (padded input columns are zero, GELU(0)=0)."""
    packed = []
    for w, b in params:
        fi, fo = w.shape
        pi, po = _round_up(fi, LANE), _round_up(fo, LANE)
        wp = jnp.pad(w, ((0, pi - fi), (0, po - fo))).astype(jnp.bfloat16)
        bp = jnp.pad(b.reshape(1, -1), ((0, 0), (0, po - fo))).astype(jnp.float32)
        packed.append((wp, bp))
    return packed


# ----------------------------------------------------------------------------
# Forward wrapper: one pallas_call, batch grid, then strip padding + Unflatten.
# ----------------------------------------------------------------------------
@partial(jax.jit, static_argnames=("output_size", "single_buffer_weights"))
def embed_block_forward(x, packed_params, *, output_size,
                        single_buffer_weights=True):
    B, input_size = x.shape
    num_layers = len(packed_params)
    in_pad = packed_params[0][0].shape[0]
    out_pad = packed_params[-1][0].shape[1]
    max_width = max([in_pad] + [w.shape[1] for w, _ in packed_params])

    vmem_cap = _vmem_capacity_bytes()

    weight_bytes = sum(w.size * w.dtype.itemsize + b.size * b.dtype.itemsize
                       for w, b in packed_params)
    weight_resident = weight_bytes * (1 if single_buffer_weights else 2)
    # NOTE: on v7x (64 MiB VMEM/TC) switch the largest layer to a K/N-tiled inner
    # loop (pltpu.emit_pipeline, Buffered(2-3)) once its packed weights exceed
    # ~1/3 of 64 MiB; on v5e/v6e (128 MiB) the threshold is correspondingly higher.

    # ---- batch tiling: balanced tiles, >=2 grid steps for v7x megacore ------
    max_tile = 512 if vmem_cap >= (100 << 20) else 256   # 512 on v5e/v6e, 256 on v7x
    g = _cdiv(B, max_tile)
    if g == 1 and B >= 2 * SUBLANE_BF16:
        g = 2                          # give the second TensorCore work on v7x
    tile_b = _round_up(_cdiv(B, g), SUBLANE_BF16)

    def act_bytes_for(tile):
        return (2 * tile * in_pad * 2        # bf16 input tile, double-buffered
                + 2 * tile * out_pad * 4     # f32 output tile, double-buffered
                + 6 * tile * max_width)      # widest intermediate (f32 + bf16 copy)

    act_budget = max(vmem_cap - (4 << 20) - weight_resident, 4 << 20)
    while tile_b > SUBLANE_BF16 and act_bytes_for(tile_b) > act_budget:
        tile_b = _round_up(tile_b // 2, SUBLANE_BF16)

    b_pad = _round_up(B, tile_b)
    grid = (b_pad // tile_b,)

    # bf16 activation streaming: half the input HBM traffic / input buffers.
    xp = jnp.pad(x, ((0, b_pad - B), (0, in_pad - input_size))).astype(jnp.bfloat16)

    weight_mode = {"pipeline_mode": pl.Buffered(1)} if single_buffer_weights else {}
    flat_args = [xp]
    in_specs = [pl.BlockSpec((tile_b, in_pad), lambda i: (i, 0),
                             memory_space=pltpu.MemorySpace.VMEM)]
    for w, b in packed_params:
        flat_args += [w, b]
        # Constant block index -> weights/biases stay VMEM-resident; Buffered(1)
        # avoids allocating a useless second pipeline buffer for them.
        in_specs.append(pl.BlockSpec(w.shape, lambda i: (0, 0),
                                     memory_space=pltpu.MemorySpace.VMEM,
                                     **weight_mode))
        in_specs.append(pl.BlockSpec(b.shape, lambda i: (0, 0),
                                     memory_space=pltpu.MemorySpace.VMEM,
                                     **weight_mode))
    out_specs = pl.BlockSpec((tile_b, out_pad), lambda i: (i, 0),
                             memory_space=pltpu.MemorySpace.VMEM)

    # Hardware-derived VMEM limit: resident weights + activation working set +
    # headroom, capped 4 MiB under physical capacity.
    needed = weight_resident + act_bytes_for(tile_b) + (4 << 20)
    vmem_limit = int(min(max(needed, 32 << 20), vmem_cap - (4 << 20)))

    hidden_widths = [w.shape[1] for w, _ in packed_params][:-1]
    flops = 2 * b_pad * sum(w.shape[0] * w.shape[1] for w, _ in packed_params)
    transcendentals = b_pad * sum(hidden_widths)            # one erf per hidden act
    bytes_accessed = xp.size * 2 + weight_bytes + b_pad * out_pad * 4

    out2d = pl.pallas_call(
        _make_mlp_kernel(num_layers),
        out_shape=jax.ShapeDtypeStruct((b_pad, out_pad), jnp.float32),
        grid=grid,
        in_specs=in_specs,
        out_specs=out_specs,
        compiler_params=pltpu.CompilerParams(
            dimension_semantics=("parallel",),       # shard batch across TCs (v7x)
            vmem_limit_bytes=vmem_limit),
        cost_estimate=pl.CostEstimate(flops=flops,
                                      transcendentals=transcendentals,
                                      bytes_accessed=bytes_accessed),
    )(*flat_args)

    # Strip batch/lane padding, then nn.Unflatten(1, (out, 1, 1)) == reshape.
    return out2d[:B, :output_size].reshape(B, output_size, 1, 1)


# ----------------------------------------------------------------------------
# References for the sanity check
# ----------------------------------------------------------------------------
def embed_block_ref_f32(x, params):
    """Exact-f32 reference == the PyTorch module's forward."""
    h = x.astype(jnp.float32)
    for i, (w, b) in enumerate(params):
        h = h @ w + b.reshape(1, -1)
        if i < len(params) - 1:
            h = 0.5 * h * (1.0 + jax.lax.erf(h * _INV_SQRT2))
    return h.reshape(x.shape[0], params[-1][0].shape[1], 1, 1)


def embed_block_ref_packed(x, packed_params, output_size):
    """Emulates the kernel's mixed precision (bf16 matmul operands, f32 accum,
    f32 bias + GELU, bf16 inter-layer activations)."""
    B, input_size = x.shape
    in_pad = packed_params[0][0].shape[0]
    h = jnp.pad(x, ((0, 0), (0, in_pad - input_size))).astype(jnp.bfloat16)
    acc = None
    for i, (w, b) in enumerate(packed_params):
        acc = jnp.dot(h.astype(jnp.float32), w.astype(jnp.float32)) + b
        if i < len(packed_params) - 1:
            acc = 0.5 * acc * (1.0 + jax.lax.erf(acc * _INV_SQRT2))
            h = acc.astype(jnp.bfloat16)
    return acc[:, :output_size].reshape(B, output_size, 1, 1)


if __name__ == "__main__":
    # Small, forward-consistent shapes: batch=8, input_size=32, layers [64, 48]
    B = 8
    input_size = 32
    layer_sizes = [64, 48]
    output_size = layer_sizes[-1]

    key = jax.random.PRNGKey(0)
    kx, kp = jax.random.split(key)
    x = jax.random.normal(kx, (B, input_size), dtype=jnp.float32)

    params = init_embed_block_params(kp, input_size, layer_sizes)
    packed = pack_embed_block_params(params)

    try:
        out = embed_block_forward(x, packed, output_size=output_size)
    except Exception:
        # Fallback: default double-buffered weight pipelining if this
        # jax/libtpu build rejects pipeline_mode=pl.Buffered(1).
        out = embed_block_forward(x, packed, output_size=output_size,
                                  single_buffer_weights=False)
    out = jax.block_until_ready(out)
    assert out.shape == (B, output_size, 1, 1), out.shape

    # Tight check vs a reference reproducing the kernel's bf16/f32 numerics.
    ref_packed = embed_block_ref_packed(x, packed, output_size)
    assert jnp.allclose(out, ref_packed, atol=1e-4, rtol=1e-4), (
        "mismatch vs packed reference:",
        float(jnp.max(jnp.abs(out - ref_packed))))

    # Loose parity check vs the exact-f32 PyTorch-equivalent forward.
    ref_f32 = embed_block_ref_f32(x, params)
    assert jnp.allclose(out, ref_f32, atol=5e-2, rtol=5e-2), (
        "mismatch vs f32 reference:",
        float(jnp.max(jnp.abs(out - ref_f32))))

    print("KERNEL_OK")
</pallas_src>

<mosaic_0001>
module attributes {stable_mosaic.version = 11 : i64} {
  func.func @kernel(%arg0: i32, %arg1: memref<16x128xbf16, #tpu.memory_space<vmem>>, %arg2: memref<128x128xbf16, #tpu.memory_space<vmem>>, %arg3: memref<1x128xf32, #tpu.memory_space<vmem>>, %arg4: memref<128x128xbf16, #tpu.memory_space<vmem>>, %arg5: memref<1x128xf32, #tpu.memory_space<vmem>>, %arg6: memref<16x128xf32, #tpu.memory_space<vmem>>) attributes {dimension_semantics = [#tpu.dimension_semantics<parallel>], iteration_bounds = array<i64: 1>, scalar_prefetch = 0 : i64, scratch_operands = 0 : i64, tpu.core_type = #tpu.core_type<tc>, window_params = [{transform_indices = @transform_0, window_bounds = array<i64: 16, 128>}, {pipeline_mode = #tpu.pipeline_mode<synchronous>, transform_indices = @transform_1, window_bounds = array<i64: 128, 128>}, {pipeline_mode = #tpu.pipeline_mode<synchronous>, transform_indices = @transform_2, window_bounds = array<i64: 1, 128>}, {pipeline_mode = #tpu.pipeline_mode<synchronous>, transform_indices = @transform_3, window_bounds = array<i64: 128, 128>}, {pipeline_mode = #tpu.pipeline_mode<synchronous>, transform_indices = @transform_4, window_bounds = array<i64: 1, 128>}, {transform_indices = @transform_5, window_bounds = array<i64: 16, 128>}]} {
    %c0 = arith.constant 0 : index
    %c0_0 = arith.constant 0 : index
    %0 = vector.load %arg1[%c0, %c0_0] : memref<16x128xbf16, #tpu.memory_space<vmem>>, vector<16x128xbf16>
    %c0_1 = arith.constant 0 : index
    %c0_2 = arith.constant 0 : index
    %1 = vector.load %arg2[%c0_1, %c0_2] : memref<128x128xbf16, #tpu.memory_space<vmem>>, vector<128x128xbf16>
    %c0_3 = arith.constant 0 : index
    %c0_4 = arith.constant 0 : index
    %2 = vector.load %arg3[%c0_3, %c0_4] : memref<1x128xf32, #tpu.memory_space<vmem>>, vector<1x128xf32>
    %cst = arith.constant dense<0.000000e+00> : vector<16x128xf32>
    %3 = tpu.matmul %0, %1, %cst {dimension_numbers = #tpu.dot_dimension_numbers<[1], [0], [0], [1], [0, 0, 1, 1], [], []>} : vector<16x128xbf16>, vector<128x128xbf16>, vector<16x128xf32> -> vector<16x128xf32>
    %4 = vector.broadcast %2 : vector<1x128xf32> to vector<16x128xf32>
    %5 = arith.addf %3, %4 : vector<16x128xf32>
    %cst_5 = arith.constant 5.000000e-01 : f32
    %6 = vector.broadcast %cst_5 : f32 to vector<16x128xf32>
    %7 = arith.mulf %6, %5 : vector<16x128xf32>
    %cst_6 = arith.constant 0.707106769 : f32
    %8 = vector.broadcast %cst_6 : f32 to vector<16x128xf32>
    %9 = arith.mulf %5, %8 : vector<16x128xf32>
    %10 = math.erf %9 : vector<16x128xf32>
    %cst_7 = arith.constant 1.000000e+00 : f32
    %11 = vector.broadcast %cst_7 : f32 to vector<16x128xf32>
    %12 = arith.addf %11, %10 : vector<16x128xf32>
    %13 = arith.mulf %7, %12 : vector<16x128xf32>
    %14 = arith.truncf %13 : vector<16x128xf32> to vector<16x128xbf16>
    %c0_8 = arith.constant 0 : index
    %c0_9 = arith.constant 0 : index
    %15 = vector.load %arg4[%c0_8, %c0_9] : memref<128x128xbf16, #tpu.memory_space<vmem>>, vector<128x128xbf16>
    %c0_10 = arith.constant 0 : index
    %c0_11 = arith.constant 0 : index
    %16 = vector.load %arg5[%c0_10, %c0_11] : memref<1x128xf32, #tpu.memory_space<vmem>>, vector<1x128xf32>
    %cst_12 = arith.constant dense<0.000000e+00> : vector<16x128xf32>
    %17 = tpu.matmul %14, %15, %cst_12 {dimension_numbers = #tpu.dot_dimension_numbers<[1], [0], [0], [1], [0, 0, 1, 1], [], []>} : vector<16x128xbf16>, vector<128x128xbf16>, vector<16x128xf32> -> vector<16x128xf32>
    %18 = vector.broadcast %16 : vector<1x128xf32> to vector<16x128xf32>
    %19 = arith.addf %17, %18 : vector<16x128xf32>
    %c0_13 = arith.constant 0 : index
    %c0_14 = arith.constant 0 : index
    %20 = vector.load %arg6[%c0_13, %c0_14] : memref<16x128xf32, #tpu.memory_space<vmem>>, vector<16x128xf32>
    tpu.vector_store %arg6[%c0_13, %c0_14], %19 {strides = array<i32>} : memref<16x128xf32, #tpu.memory_space<vmem>>, vector<16x128xf32>,
    return
  }
  func.func @transform_0(%arg0: i32) -> (i32, i32) {
    %c0_i32 = arith.constant 0 : i32
    %c0_i32_0 = arith.constant 0 : i32
    return %arg0, %c0_i32 : i32, i32
  }
  func.func @transform_1(%arg0: i32) -> (i32, i32) {
    %c0_i32 = arith.constant 0 : i32
    %c0_i32_0 = arith.constant 0 : i32
    %c0_i32_1 = arith.constant 0 : i32
    return %c0_i32, %c0_i32_0 : i32, i32
  }
  func.func @transform_2(%arg0: i32) -> (i32, i32) {
    %c0_i32 = arith.constant 0 : i32
    %c0_i32_0 = arith.constant 0 : i32
    %c0_i32_1 = arith.constant 0 : i32
    return %c0_i32, %c0_i32_0 : i32, i32
  }
  func.func @transform_3(%arg0: i32) -> (i32, i32) {
    %c0_i32 = arith.constant 0 : i32
    %c0_i32_0 = arith.constant 0 : i32
    %c0_i32_1 = arith.constant 0 : i32
    return %c0_i32, %c0_i32_0 : i32, i32
  }
  func.func @transform_4(%arg0: i32) -> (i32, i32) {
    %c0_i32 = arith.constant 0 : i32
    %c0_i32_0 = arith.constant 0 : i32
    %c0_i32_1 = arith.constant 0 : i32
    return %c0_i32, %c0_i32_0 : i32, i32
  }
  func.func @transform_5(%arg0: i32) -> (i32, i32) {
    %c0_i32 = arith.constant 0 : i32
    %c0_i32_0 = arith.constant 0 : i32
    return %arg0, %c0_i32 : i32, i32
  }
}

module attributes {stable_mosaic.version = 11 : i64} {
  func.func @kernel(%arg0: i32, %arg1: memref<16x128xbf16, #tpu.memory_space<vmem>>, %arg2: memref<128x128xbf16, #tpu.memory_space<vmem>>, %arg3: memref<1x128xf32, #tpu.memory_space<vmem>>, %arg4: memref<128x128xbf16, #tpu.memory_space<vmem>>, %arg5: memref<1x128xf32, #tpu.memory_space<vmem>>, %arg6: memref<16x128xf32, #tpu.memory_space<vmem>>) attributes {dimension_semantics = [#tpu.dimension_semantics<parallel>], iteration_bounds = array<i64: 1>, scalar_prefetch = 0 : i64, scratch_operands = 0 : i64, tpu.core_type = #tpu.core_type<tc>, window_params = [{transform_indices = @transform_0, window_bounds = array<i64: 16, 128>}, {pipeline_mode = #tpu.pipeline_mode<synchronous>, transform_indices = @transform_1, window_bounds = array<i64: 128, 128>}, {pipeline_mode = #tpu.pipeline_mode<synchronous>, transform_indices = @transform_2, window_bounds = array<i64: 1, 128>}, {pipeline_mode = #tpu.pipeline_mode<synchronous>, transform_indices = @transform_3, window_bounds = array<i64: 128, 128>}, {pipeline_mode = #tpu.pipeline_mode<synchronous>, transform_indices = @transform_4, window_bounds = array<i64: 1, 128>}, {transform_indices = @transform_5, window_bounds = array<i64: 16, 128>}]} {
    %c0 = arith.constant 0 : index
    %c0_0 = arith.constant 0 : index
    %0 = vector.load %arg1[%c0, %c0_0] : memref<16x128xbf16, #tpu.memory_space<vmem>>, vector<16x128xbf16>
    %c0_1 = arith.constant 0 : index
    %c0_2 = arith.constant 0 : index
    %1 = vector.load %arg2[%c0_1, %c0_2] : memref<128x128xbf16, #tpu.memory_space<vmem>>, vector<128x128xbf16>
    %c0_3 = arith.constant 0 : index
    %c0_4 = arith.constant 0 : index
    %2 = vector.load %arg3[%c0_3, %c0_4] : memref<1x128xf32, #tpu.memory_space<vmem>>, vector<1x128xf32>
    %cst = arith.constant dense<0.000000e+00> : vector<16x128xf32>
    %3 = tpu.matmul %0, %1, %cst {dimension_numbers = #tpu.dot_dimension_numbers<[1], [0], [0], [1], [0, 0, 1, 1], [], []>} : vector<16x128xbf16>, vector<128x128xbf16>, vector<16x128xf32> -> vector<16x128xf32>
    %4 = vector.broadcast %2 : vector<1x128xf32> to vector<16x128xf32>
    %5 = arith.addf %3, %4 : vector<16x128xf32>
    %cst_5 = arith.constant 5.000000e-01 : f32
    %6 = vector.broadcast %cst_5 : f32 to vector<16x128xf32>
    %7 = arith.mulf %6, %5 : vector<16x128xf32>
    %cst_6 = arith.constant 0.707106769 : f32
    %8 = vector.broadcast %cst_6 : f32 to vector<16x128xf32>
    %9 = arith.mulf %5, %8 : vector<16x128xf32>
    %10 = math.erf %9 : vector<16x128xf32>
    %cst_7 = arith.constant 1.000000e+00 : f32
    %11 = vector.broadcast %cst_7 : f32 to vector<16x128xf32>
    %12 = arith.addf %11, %10 : vector<16x128xf32>
    %13 = arith.mulf %7, %12 : vector<16x128xf32>
    %14 = arith.truncf %13 : vector<16x128xf32> to vector<16x128xbf16>
    %c0_8 = arith.constant 0 : index
    %c0_9 = arith.constant 0 : index
    %15 = vector.load %arg4[%c0_8, %c0_9] : memref<128x128xbf16, #tpu.memory_space<vmem>>, vector<128x128xbf16>
    %c0_10 = arith.constant 0 : index
    %c0_11 = arith.constant 0 : index
    %16 = vector.load %arg5[%c0_10, %c0_11] : memref<1x128xf32, #tpu.memory_space<vmem>>, vector<1x128xf32>
    %cst_12 = arith.constant dense<0.000000e+00> : vector<16x128xf32>
    %17 = tpu.matmul %14, %15, %cst_12 {dimension_numbers = #tpu.dot_dimension_numbers<[1], [0], [0], [1], [0, 0, 1, 1], [], []>} : vector<16x128xbf16>, vector<128x128xbf16>, vector<16x128xf32> -> vector<16x128xf32>
    %18 = vector.broadcast %16 : vector<1x128xf32> to vector<16x128xf32>
    %19 = arith.addf %17, %18 : vector<16x128xf32>
    %c0_13 = arith.constant 0 : index
    %c0_14 = arith.constant 0 : index
    %20 = vector.load %arg6[%c0_13, %c0_14] : memref<16x128xf32, #tpu.memory_space<vmem>>, vector<16x128xf32>
    tpu.vector_store %arg6[%c0_13, %c0_14], %19 {strides = array<i32>} : memref<16x128xf32, #tpu.memory_space<vmem>>, vector<16x128xf32>,
    return
  }
  func.func @transform_0(%arg0: i32) -> (i32, i32) {
    %c0_i32 = arith.constant 0 : i32
    %c0_i32_0 = arith.constant 0 : i32
    return %arg0, %c0_i32 : i32, i32
  }
  func.func @transform_1(%arg0: i32) -> (i32, i32) {
    %c0_i32 = arith.constant 0 : i32
    %c0_i32_0 = arith.constant 0 : i32
    %c0_i32_1 = arith.constant 0 : i32
    return %c0_i32, %c0_i32_0 : i32, i32
  }
  func.func @transform_2(%arg0: i32) -> (i32, i32) {
    %c0_i32 = arith.constant 0 : i32
    %c0_i32_0 = arith.constant 0 : i32
    %c0_i32_1 = arith.constant 0 : i32
    return %c0_i32, %c0_i32_0 : i32, i32
  }
  func.func @transform_3(%arg0: i32) -> (i32, i32) {
    %c0_i32 = arith.constant 0 : i32
    %c0_i32_0 = arith.constant 0 : i32
    %c0_i32_1 = arith.constant 0 : i32
    return %c0_i32, %c0_i32_0 : i32, i32
  }
  func.func @transform_4(%arg0: i32) -> (i32, i32) {
    %c0_i32 = arith.constant 0 : i32
    %c0_i32_0 = arith.constant 0 : i32
    %c0_i32_1 = arith.constant 0 : i32
    return %c0_i32, %c0_i32_0 : i32, i32
  }
  func.func @transform_5(%arg0: i32) -> (i32, i32) {
    %c0_i32 = arith.constant 0 : i32
    %c0_i32_0 = arith.constant 0 : i32
    return %arg0, %c0_i32 : i32, i32
  }
}

</mosaic_0001>

<llo_original>
// kernel: embed_block_forward.1
$region0: #{embed_block_forward.1}
  #allocation0 [shape = 'u32[]', space=smem, size = 0x4, offset = 0x4, fixed_abs, tag = 'smem constant byte address 0x4 - core index']
  #allocation1 [shape = 'u32[144,128]{1,0:T(1,128)}', space=vmem, size = 0x12000, scoped, tag = 'internal scratch']
  %s0 = inlined_call_operand.vmem [shape: bf16[16,128], index: 0, kind: input, shape index: {}]
  %s1 = inlined_call_operand.hbm [shape: bf16[128,128], index: 1, kind: input, shape index: {}]
  %s2 = inlined_call_operand.vmem [shape: f32[1,128], index: 2, kind: input, shape index: {}]
  %s3 = inlined_call_operand.hbm [shape: bf16[128,128], index: 3, kind: input, shape index: {}]
  %s4 = inlined_call_operand.vmem [shape: f32[1,128], index: 4, kind: input, shape index: {}]
  %s5 = inlined_call_operand.vmem [shape: f32[16,128], index: 5, kind: output, shape index: {}]
  %s6 = sld [smem:[#allocation0]]
  $region38: #{embed_block_forward.1} parent=0
    _
  %s8 = ssub.s32 1, %s6
  %s9 = scalar_select 0, %s8, %s6
  $region1: #{embed_block_forward.1} parent=0
    #allocation2 [shape = 'u8[32768]{0}', space=vmem, size = 0x8000, scoped, tag = 'input window, operand 1, single buffered']
    #allocation3 [shape = 's32[1]{0}', space=sflag, size = 0x4, scoped, tag = 'scoped memory for embed_block_forward.1']
    #allocation4 [shape = 'u8[32768]{0}', space=vmem, size = 0x8000, scoped, tag = 'input window, operand 3, single buffered']
    #allocation5 [shape = 's32[1]{0}', space=sflag, size = 0x4, scoped, tag = 'scoped memory for embed_block_forward.1']
    %10 = vsyncpa [#allocation3], 0
    %11 = vsyncpa [#allocation5], 0
    // Predicated region
    $region2: #{embed_block_forward.1} parent=1 // pred_check
      _
    $region3: #{embed_block_forward.1} parent=1 // pred_check_branch
      %13 = sbr.rel (0) target = $region5
    $region4: #{embed_block_forward.1} parent=1 // pred_region
      _
    $region5: #{embed_block_forward.1} parent=1 // pred_fallthru
      _
    // Predicated region
    $region6: #{embed_block_forward.1} parent=1 // pred_check
      _
    $region7: #{embed_block_forward.1} parent=1 // pred_check_branch
      %15 = sbr.rel (0) target = $region9
    $region8: #{embed_block_forward.1} parent=1 // pred_region
      %s17 = ssub.s32 1024, 1024
      %18 = vsyncadd [#allocation3], %s17
      %s19 = sshll.u32 [#allocation2], 4
      %s20 = int_to_ptr.vmem [resolvable:$true] %s19
      %25 = dma.hbm_to_vmem [thread:$0]  %s1, 1024, %s20, [#allocation3], 64, 64, 4
    $region9: #{embed_block_forward.1} parent=1 // pred_fallthru
      _
    // Predicated region
    $region10: #{embed_block_forward.1} parent=1 // pred_check
      _
    $region11: #{embed_block_forward.1} parent=1 // pred_check_branch
      %27 = sbr.rel (0) target = $region13
    $region12: #{embed_block_forward.1} parent=1 // pred_region
      _
    $region13: #{embed_block_forward.1} parent=1 // pred_fallthru
      _
    // Predicated region
    $region14: #{embed_block_forward.1} parent=1 // pred_check
      _
    $region15: #{embed_block_forward.1} parent=1 // pred_check_branch
      %29 = sbr.rel (0) target = $region17
    $region16: #{embed_block_forward.1} parent=1 // pred_region
      %s31 = ssub.s32 1024, 1024
      %32 = vsyncadd [#allocation5], %s31
      %s33 = sshll.u32 [#allocation4], 4
      %s34 = int_to_ptr.vmem [resolvable:$true] %s33
      %39 = dma.hbm_to_vmem [thread:$0]  %s3, 1024, %s34, [#allocation5], 64, 64, 4
    $region17: #{embed_block_forward.1} parent=1 // pred_fallthru
      _
    // Predicated region
    $region18: #{embed_block_forward.1} parent=1 // pred_check
      _
    $region19: #{embed_block_forward.1} parent=1 // pred_check_branch
      %41 = sbr.rel (0) target = $region21
    $region20: #{embed_block_forward.1} parent=1 // pred_region
      _
    $region21: #{embed_block_forward.1} parent=1 // pred_fallthru
      _
    // Predicated region
    $region22: #{embed_block_forward.1} parent=1 // pred_check
      _
    $region23: #{embed_block_forward.1} parent=1 // pred_check_branch
      %43 = sbr.rel (0) target = $region25
    $region24: #{embed_block_forward.1} parent=1 // pred_region
      %44 = dma.done [#allocation3], 1024
    $region25: #{embed_block_forward.1} parent=1 // pred_fallthru
      _
    // Predicated region
    $region26: #{embed_block_forward.1} parent=1 // pred_check
      _
    $region27: #{embed_block_forward.1} parent=1 // pred_check_branch
      %46 = sbr.rel (0) target = $region29
    $region28: #{embed_block_forward.1} parent=1 // pred_region
      %47 = dma.done [#allocation5], 1024
    $region29: #{embed_block_forward.1} parent=1 // pred_fallthru
      _
    %v49 = vld [vmem:[%s0] sm:$0xf]
    %v50 = vld [vmem:[%s0 + $0x4] sm:$0xf]
    %v51 = vld [vmem:[#allocation2] sm:$0xf]
    %v52 = vld [vmem:[#allocation2 + $0x4] sm:$0xf]
    %v53 = vld [vmem:[#allocation2 + $0x8] sm:$0xf]
    %v54 = vld [vmem:[#allocation2 + $0xc] sm:$0xf]
    %v55 = vld [vmem:[#allocation2 + $0x10] sm:$0xf]
    %v56 = vld [vmem:[#allocation2 + $0x14] sm:$0xf]
    %v57 = vld [vmem:[#allocation2 + $0x18] sm:$0xf]
    %v58 = vld [vmem:[#allocation2 + $0x1c] sm:$0xf]
    %v59 = vld [vmem:[#allocation2 + $0x20] sm:$0xf]
    %v60 = vld [vmem:[#allocation2 + $0x24] sm:$0xf]
    %v61 = vld [vmem:[#allocation2 + $0x28] sm:$0xf]
    %v62 = vld [vmem:[#allocation2 + $0x2c] sm:$0xf]
    %v63 = vld [vmem:[#allocation2 + $0x30] sm:$0xf]
    %v64 = vld [vmem:[#allocation2 + $0x34] sm:$0xf]
    %v65 = vld [vmem:[#allocation2 + $0x38] sm:$0xf]
    %v66 = vld [vmem:[#allocation2 + $0x3c] sm:$0xf]
    %v67 = vld [vmem:[%s2] sm:$0x1]
    %v69 = vlaneseq
    %v70 = vshrl.u32 %v69, 7
    %v71 = vsub.s32 0, %v70
    %v72 = vrot.slane %v67, %v71
    %v76 = vunpack.c.l.b16 %v49
    %v77 = vunpack.c.l.b16 %v50
    %v78 = vpack.c.b16 %v77, %v76
    %v96 = vunpack.c.l.b16 %v51
    %v97 = vunpack.c.l.b16 %v52
    %v98 = vunpack.c.l.b16 %v53
    %v99 = vunpack.c.l.b16 %v54
    %v100 = vunpack.c.l.b16 %v55
    %v101 = vunpack.c.l.b16 %v56
    %v102 = vunpack.c.l.b16 %v57
    %v103 = vunpack.c.l.b16 %v58
    %v104 = vunpack.c.l.b16 %v59
    %v105 = vunpack.c.l.b16 %v60
    %v106 = vunpack.c.l.b16 %v61
    %v107 = vunpack.c.l.b16 %v62
    %v108 = vunpack.c.l.b16 %v63
    %v109 = vunpack.c.l.b16 %v64
    %v110 = vunpack.c.l.b16 %v65
    %v111 = vunpack.c.l.b16 %v66
    %v112 = vpack.c.b16 %v97, %v96
    %v113 = vpack.c.b16 %v99, %v98
    %v114 = vpack.c.b16 %v101, %v100
    %v115 = vpack.c.b16 %v103, %v102
    %v116 = vpack.c.b16 %v105, %v104
    %v117 = vpack.c.b16 %v107, %v106
    %v118 = vpack.c.b16 %v109, %v108
    %v119 = vpack.c.b16 %v111, %v110
    %128 = vmatprep.subr.bf16.mxu0 0
    %129 = vmatpush1.bf16.msra.mxu0 %v119
    %130 = vmatprep.subr.bf16.mxu0 0
    %131 = vmatpush1.bf16.msra.mxu0 %v118
    %132 = vmatprep.subr.bf16.mxu0 0
    %133 = vmatpush1.bf16.msra.mxu0 %v117
    %134 = vmatprep.subr.bf16.mxu0 0
    %135 = vmatpush1.bf16.msra.mxu0 %v116
    %136 = vmatprep.subr.bf16.mxu0 0
    %137 = vmatpush1.bf16.msra.mxu0 %v115
    %138 = vmatprep.subr.bf16.mxu0 0
    %139 = vmatpush1.bf16.msra.mxu0 %v114
    %140 = vmatprep.subr.bf16.mxu0 0
    %141 = vmatpush1.bf16.msra.mxu0 %v113
    %142 = vmatprep.subr.bf16.mxu0 0
    %143 = vmatpush1.bf16.msra.mxu0 %v112
    %144 = vmatprep.subr.bf16.mxu0 0
    %145 = vmatpush2.bf16.msra.mxu0 0
    %146 = vmatprep.subr.bf16.mxu0 0
    %147 = vmatpush2.bf16.msra.mxu0 0
    %148 = vmatprep.subr.bf16.mxu0 0
    %149 = vmatpush2.bf16.msra.mxu0 0
    %150 = vmatprep.subr.bf16.mxu0 0
    %151 = vmatpush2.bf16.msra.mxu0 0
    %152 = vmatprep.subr.bf16.mxu0 0
    %153 = vmatpush2.bf16.msra.mxu0 0
    %154 = vmatprep.subr.bf16.mxu0 0
    %155 = vmatpush2.bf16.msra.mxu0 0
    %156 = vmatprep.subr.bf16.mxu0 0
    %157 = vmatpush2.bf16.msra.mxu0 0
    %158 = vmatprep.subr.bf16.mxu0 0
    %159 = vmatpush2.bf16.msra.mxu0 0
    %160 = vmatprep.mubr.bf16.mxu0 0
    %161 = vmatmul.mubr.bf16.gmra.mxu0 %v78
    %v162 = vpop.f32.mrf.mxu0
    %v163 = vadd.f32 %v72, %v162
    %v164 = vpop.f32.mrf.mxu0
    %v165 = vpop.f32.mrf.mxu0
    %v166 = vadd.f32 %v72, %v165
    %v167 = vpop.f32.mrf.mxu0
    %168 = vdwg.mxu0
    %v169 = vmul.f32 %v163, 0.5
    %v170 = vmul.f32 %v166, 0.5
    %v171 = vmul.f32 %v163, 0.70710677
    %v172 = vmul.f32 %v166, 0.70710677
    %v173 = verf.f32.pop %v171
    %v174 = verf.f32.pop %v172
    %v175 = vadd.f32 %v173, 1.0
    %v176 = vadd.f32 %v174, 1.0
    %v177 = vmul.f32 %v169, %v175
    %v178 = vmul.f32 %v170, %v176
    %v179 = vpack.c.bf16 %v178, %v177
    %v180 = vld [vmem:[#allocation4] sm:$0xf]
    %v181 = vld [vmem:[#allocation4 + $0x4] sm:$0xf]
    %v182 = vld [vmem:[#allocation4 + $0x8] sm:$0xf]
    %v183 = vld [vmem:[#allocation4 + $0xc] sm:$0xf]
    %v184 = vld [vmem:[#allocation4 + $0x10] sm:$0xf]
    %v185 = vld [vmem:[#allocation4 + $0x14] sm:$0xf]
    %v186 = vld [vmem:[#allocation4 + $0x18] sm:$0xf]
    %v187 = vld [vmem:[#allocation4 + $0x1c] sm:$0xf]
    %v188 = vld [vmem:[#allocation4 + $0x20] sm:$0xf]
    %v189 = vld [vmem:[#allocation4 + $0x24] sm:$0xf]
    %v190 = vld [vmem:[#allocation4 + $0x28] sm:$0xf]
    %v191 = vld [vmem:[#allocation4 + $0x2c] sm:$0xf]
    %v192 = vld [vmem:[#allocation4 + $0x30] sm:$0xf]
    %v193 = vld [vmem:[#allocation4 + $0x34] sm:$0xf]
    %v194 = vld [vmem:[#allocation4 + $0x38] sm:$0xf]
    %v195 = vld [vmem:[#allocation4 + $0x3c] sm:$0xf]
    %v196 = vld [vmem:[%s4] sm:$0x1]
    %v198 = vlaneseq
    %v199 = vshrl.u32 %v198, 7
    %v200 = vsub.s32 0, %v199
    %v201 = vrot.slane %v196, %v200
    %v219 = vunpack.c.l.b16 %v180
    %v220 = vunpack.c.l.b16 %v181
    %v221 = vunpack.c.l.b16 %v182
    %v222 = vunpack.c.l.b16 %v183
    %v223 = vunpack.c.l.b16 %v184
    %v224 = vunpack.c.l.b16 %v185
    %v225 = vunpack.c.l.b16 %v186
    %v226 = vunpack.c.l.b16 %v187
    %v227 = vunpack.c.l.b16 %v188
    %v228 = vunpack.c.l.b16 %v189
    %v229 = vunpack.c.l.b16 %v190
    %v230 = vunpack.c.l.b16 %v191
    %v231 = vunpack.c.l.b16 %v192
    %v232 = vunpack.c.l.b16 %v193
    %v233 = vunpack.c.l.b16 %v194
    %v234 = vunpack.c.l.b16 %v195
    %v235 = vpack.c.b16 %v220, %v219
    %v236 = vpack.c.b16 %v222, %v221
    %v237 = vpack.c.b16 %v224, %v223
    %v238 = vpack.c.b16 %v226, %v225
    %v239 = vpack.c.b16 %v228, %v227
    %v240 = vpack.c.b16 %v230, %v229
    %v241 = vpack.c.b16 %v232, %v231
    %v242 = vpack.c.b16 %v234, %v233
    %251 = vmatprep.subr.bf16.mxu0 0
    %252 = vmatpush1.bf16.msra.mxu0 %v242
    %253 = vmatprep.subr.bf16.mxu0 0
    %254 = vmatpush1.bf16.msra.mxu0 %v241
    %255 = vmatprep.subr.bf16.mxu0 0
    %256 = vmatpush1.bf16.msra.mxu0 %v240
    %257 = vmatprep.subr.bf16.mxu0 0
    %258 = vmatpush1.bf16.msra.mxu0 %v239
    %259 = vmatprep.subr.bf16.mxu0 0
    %260 = vmatpush1.bf16.msra.mxu0 %v238
    %261 = vmatprep.subr.bf16.mxu0 0
    %262 = vmatpush1.bf16.msra.mxu0 %v237
    %263 = vmatprep.subr.bf16.mxu0 0
    %264 = vmatpush1.bf16.msra.mxu0 %v236
    %265 = vmatprep.subr.bf16.mxu0 0
    %266 = vmatpush1.bf16.msra.mxu0 %v235
    %267 = vmatprep.subr.bf16.mxu0 0
    %268 = vmatpush2.bf16.msra.mxu0 0
    %269 = vmatprep.subr.bf16.mxu0 0
    %270 = vmatpush2.bf16.msra.mxu0 0
    %271 = vmatprep.subr.bf16.mxu0 0
    %272 = vmatpush2.bf16.msra.mxu0 0
    %273 = vmatprep.subr.bf16.mxu0 0
    %274 = vmatpush2.bf16.msra.mxu0 0
    %275 = vmatprep.subr.bf16.mxu0 0
    %276 = vmatpush2.bf16.msra.mxu0 0
    %277 = vmatprep.subr.bf16.mxu0 0
    %278 = vmatpush2.bf16.msra.mxu0 0
    %279 = vmatprep.subr.bf16.mxu0 0
    %280 = vmatpush2.bf16.msra.mxu0 0
    %281 = vmatprep.subr.bf16.mxu0 0
    %282 = vmatpush2.bf16.msra.mxu0 0
    %283 = vmatprep.mubr.bf16.mxu0 0
    %284 = vmatmul.mubr.bf16.gmra.mxu0 %v179
    %v285 = vpop.f32.mrf.mxu0
    %v286 = vadd.f32 %v201, %v285
    %v287 = vpop.f32.mrf.mxu0
    %v288 = vpop.f32.mrf.mxu0
    %v289 = vadd.f32 %v201, %v288
    %v290 = vpop.f32.mrf.mxu0
    %291 = vdwg.mxu0
    %292 = vst [vmem:[%s5] sm:$0xff] %v286
    %293 = vst [vmem:[%s5 + $0x8] sm:$0xff] %v289
    // Predicated region
    $region30: #{embed_block_forward.1} parent=1 // pred_check
      _
    $region31: #{embed_block_forward.1} parent=1 // pred_check_branch
      %295 = sbr.rel (0) target = $region33
    $region32: #{embed_block_forward.1} parent=1 // pred_region
      _
    $region33: #{embed_block_forward.1} parent=1 // pred_fallthru
      _
    // Predicated region
    $region34: #{embed_block_forward.1} parent=1 // pred_check
      _
    $region35: #{embed_block_forward.1} parent=1 // pred_check_branch
      %297 = sbr.rel (0) target = $region37
    $region36: #{embed_block_forward.1} parent=1 // pred_region
      _
    $region37: #{embed_block_forward.1} parent=1 // pred_fallthru
      _
    %298 = vsyncpa [#allocation3], 1
    %299 = vsyncpa [#allocation5], 1

// kernel: embed_block_forward.1
$region0: #{embed_block_forward.1}
  #allocation0 [shape = 'u32[]', space=smem, size = 0x4, offset = 0x4, fixed_abs, tag = 'smem constant byte address 0x4 - core index']
  #allocation1 [shape = 'u32[144,128]{1,0:T(1,128)}', space=vmem, size = 0x12000, scoped, tag = 'internal scratch']
  %s0 = inlined_call_operand.vmem [shape: bf16[16,128], index: 0, kind: input, shape index: {}]
  %s1 = inlined_call_operand.hbm [shape: bf16[128,128], index: 1, kind: input, shape index: {}]
  %s2 = inlined_call_operand.vmem [shape: f32[1,128], index: 2, kind: input, shape index: {}]
  %s3 = inlined_call_operand.hbm [shape: bf16[128,128], index: 3, kind: input, shape index: {}]
  %s4 = inlined_call_operand.vmem [shape: f32[1,128], index: 4, kind: input, shape index: {}]
  %s5 = inlined_call_operand.vmem [shape: f32[16,128], index: 5, kind: output, shape index: {}]
  %s6 = sld [smem:[#allocation0]]
  $region38: #{embed_block_forward.1} parent=0
    _
  %s8 = ssub.s32 1, %s6
  %s9 = scalar_select 0, %s8, %s6
  $region1: #{embed_block_forward.1} parent=0
    #allocation2 [shape = 'u8[32768]{0}', space=vmem, size = 0x8000, scoped, tag = 'input window, operand 1, single buffered']
    #allocation3 [shape = 's32[1]{0}', space=sflag, size = 0x4, scoped, tag = 'scoped memory for embed_block_forward.1']
    #allocation4 [shape = 'u8[32768]{0}', space=vmem, size = 0x8000, scoped, tag = 'input window, operand 3, single buffered']
    #allocation5 [shape = 's32[1]{0}', space=sflag, size = 0x4, scoped, tag = 'scoped memory for embed_block_forward.1']
    %10 = vsyncpa [#allocation3], 0
    %11 = vsyncpa [#allocation5], 0
    // Predicated region
    $region2: #{embed_block_forward.1} parent=1 // pred_check
      _
    $region3: #{embed_block_forward.1} parent=1 // pred_check_branch
      %13 = sbr.rel (0) target = $region5
    $region4: #{embed_block_forward.1} parent=1 // pred_region
      _
    $region5: #{embed_block_forward.1} parent=1 // pred_fallthru
      _
    // Predicated region
    $region6: #{embed_block_forward.1} parent=1 // pred_check
      _
    $region7: #{embed_block_forward.1} parent=1 // pred_check_branch
      %15 = sbr.rel (0) target = $region9
    $region8: #{embed_block_forward.1} parent=1 // pred_region
      %s17 = ssub.s32 1024, 1024
      %18 = vsyncadd [#allocation3], %s17
      %s19 = sshll.u32 [#allocation2], 4
      %s20 = int_to_ptr.vmem [resolvable:$true] %s19
      %25 = dma.hbm_to_vmem [thread:$0]  %s1, 1024, %s20, [#allocation3], 64, 64, 4
    $region9: #{embed_block_forward.1} parent=1 // pred_fallthru
      _
    // Predicated region
    $region10: #{embed_block_forward.1} parent=1 // pred_check
      _
    $region11: #{embed_block_forward.1} parent=1 // pred_check_branch
      %27 = sbr.rel (0) target = $region13
    $region12: #{embed_block_forward.1} parent=1 // pred_region
      _
    $region13: #{embed_block_forward.1} parent=1 // pred_fallthru
      _
    // Predicated region
    $region14: #{embed_block_forward.1} parent=1 // pred_check
      _
    $region15: #{embed_block_forward.1} parent=1 // pred_check_branch
      %29 = sbr.rel (0) target = $region17
    $region16: #{embed_block_forward.1} parent=1 // pred_region
      %s31 = ssub.s32 1024, 1024
      %32 = vsyncadd [#allocation5], %s31
      %s33 = sshll.u32 [#allocation4], 4
      %s34 = int_to_ptr.vmem [resolvable:$true] %s33
      %39 = dma.hbm_to_vmem [thread:$0]  %s3, 1024, %s34, [#allocation5], 64, 64, 4
    $region17: #{embed_block_forward.1} parent=1 // pred_fallthru
      _
    // Predicated region
    $region18: #{embed_block_forward.1} parent=1 // pred_check
      _
    $region19: #{embed_block_forward.1} parent=1 // pred_check_branch
      %41 = sbr.rel (0) target = $region21
    $region20: #{embed_block_forward.1} parent=1 // pred_region
      _
    $region21: #{embed_block_forward.1} parent=1 // pred_fallthru
      _
    // Predicated region
    $region22: #{embed_block_forward.1} parent=1 // pred_check
      _
    $region23: #{embed_block_forward.1} parent=1 // pred_check_branch
      %43 = sbr.rel (0) target = $region25
    $region24: #{embed_block_forward.1} parent=1 // pred_region
      %44 = dma.done [#allocation3], 1024
    $region25: #{embed_block_forward.1} parent=1 // pred_fallthru
      _
    // Predicated region
    $region26: #{embed_block_forward.1} parent=1 // pred_check
      _
    $region27: #{embed_block_forward.1} parent=1 // pred_check_branch
      %46 = sbr.rel (0) target = $region29
    $region28: #{embed_block_forward.1} parent=1 // pred_region
      %47 = dma.done [#allocation5], 1024
    $region29: #{embed_block_forward.1} parent=1 // pred_fallthru
      _
    %v49 = vld [vmem:[%s0] sm:$0xf]
    %v50 = vld [vmem:[%s0 + $0x4] sm:$0xf]
    %v51 = vld [vmem:[#allocation2] sm:$0xf]
    %v52 = vld [vmem:[#allocation2 + $0x4] sm:$0xf]
    %v53 = vld [vmem:[#allocation2 + $0x8] sm:$0xf]
    %v54 = vld [vmem:[#allocation2 + $0xc] sm:$0xf]
    %v55 = vld [vmem:[#allocation2 + $0x10] sm:$0xf]
    %v56 = vld [vmem:[#allocation2 + $0x14] sm:$0xf]
    %v57 = vld [vmem:[#allocation2 + $0x18] sm:$0xf]
    %v58 = vld [vmem:[#allocation2 + $0x1c] sm:$0xf]
    %v59 = vld [vmem:[#allocation2 + $0x20] sm:$0xf]
    %v60 = vld [vmem:[#allocation2 + $0x24] sm:$0xf]
    %v61 = vld [vmem:[#allocation2 + $0x28] sm:$0xf]
    %v62 = vld [vmem:[#allocation2 + $0x2c] sm:$0xf]
    %v63 = vld [vmem:[#allocation2 + $0x30] sm:$0xf]
    %v64 = vld [vmem:[#allocation2 + $0x34] sm:$0xf]
    %v65 = vld [vmem:[#allocation2 + $0x38] sm:$0xf]
    %v66 = vld [vmem:[#allocation2 + $0x3c] sm:$0xf]
    %v67 = vld [vmem:[%s2] sm:$0x1]
    %v69 = vlaneseq
    %v70 = vshrl.u32 %v69, 7
    %v71 = vsub.s32 0, %v70
    %v72 = vrot.slane %v67, %v71
    %v76 = vunpack.c.l.b16 %v49
    %v77 = vunpack.c.l.b16 %v50
    %v78 = vpack.c.b16 %v77, %v76
    %v96 = vunpack.c.l.b16 %v51
    %v97 = vunpack.c.l.b16 %v52
    %v98 = vunpack.c.l.b16 %v53
    %v99 = vunpack.c.l.b16 %v54
    %v100 = vunpack.c.l.b16 %v55
    %v101 = vunpack.c.l.b16 %v56
    %v102 = vunpack.c.l.b16 %v57
    %v103 = vunpack.c.l.b16 %v58
    %v104 = vunpack.c.l.b16 %v59
    %v105 = vunpack.c.l.b16 %v60
    %v106 = vunpack.c.l.b16 %v61
    %v107 = vunpack.c.l.b16 %v62
    %v108 = vunpack.c.l.b16 %v63
    %v109 = vunpack.c.l.b16 %v64
    %v110 = vunpack.c.l.b16 %v65
    %v111 = vunpack.c.l.b16 %v66
    %v112 = vpack.c.b16 %v97, %v96
    %v113 = vpack.c.b16 %v99, %v98
    %v114 = vpack.c.b16 %v101, %v100
    %v115 = vpack.c.b16 %v103, %v102
    %v116 = vpack.c.b16 %v105, %v104
    %v117 = vpack.c.b16 %v107, %v106
    %v118 = vpack.c.b16 %v109, %v108
    %v119 = vpack.c.b16 %v111, %v110
    %128 = vmatprep.subr.bf16.mxu0 0
    %129 = vmatpush1.bf16.msra.mxu0 %v119
    %130 = vmatprep.subr.bf16.mxu0 0
    %131 = vmatpush1.bf16.msra.mxu0 %v118
    %132 = vmatprep.subr.bf16.mxu0 0
    %133 = vmatpush1.bf16.msra.mxu0 %v117
    %134 = vmatprep.subr.bf16.mxu0 0
    %135 = vmatpush1.bf16.msra.mxu0 %v116
    %136 = vmatprep.subr.bf16.mxu0 0
    %137 = vmatpush1.bf16.msra.mxu0 %v115
    %138 = vmatprep.subr.bf16.mxu0 0
    %139 = vmatpush1.bf16.msra.mxu0 %v114
    %140 = vmatprep.subr.bf16.mxu0 0
    %141 = vmatpush1.bf16.msra.mxu0 %v113
    %142 = vmatprep.subr.bf16.mxu0 0
    %143 = vmatpush1.bf16.msra.mxu0 %v112
    %144 = vmatprep.subr.bf16.mxu0 0
    %145 = vmatpush2.bf16.msra.mxu0 0
    %146 = vmatprep.subr.bf16.mxu0 0
    %147 = vmatpush2.bf16.msra.mxu0 0
    %148 = vmatprep.subr.bf16.mxu0 0
    %149 = vmatpush2.bf16.msra.mxu0 0
    %150 = vmatprep.subr.bf16.mxu0 0
    %151 = vmatpush2.bf16.msra.mxu0 0
    %152 = vmatprep.subr.bf16.mxu0 0
    %153 = vmatpush2.bf16.msra.mxu0 0
    %154 = vmatprep.subr.bf16.mxu0 0
    %155 = vmatpush2.bf16.msra.mxu0 0
    %156 = vmatprep.subr.bf16.mxu0 0
    %157 = vmatpush2.bf16.msra.mxu0 0
    %158 = vmatprep.subr.bf16.mxu0 0
    %159 = vmatpush2.bf16.msra.mxu0 0
    %160 = vmatprep.mubr.bf16.mxu0 0
    %161 = vmatmul.mubr.bf16.gmra.mxu0 %v78
    %v162 = vpop.f32.mrf.mxu0
    %v163 = vadd.f32 %v72, %v162
    %v164 = vpop.f32.mrf.mxu0
    %v165 = vpop.f32.mrf.mxu0
    %v166 = vadd.f32 %v72, %v165
    %v167 = vpop.f32.mrf.mxu0
    %168 = vdwg.mxu0
    %v169 = vmul.f32 %v163, 0.5
    %v170 = vmul.f32 %v166, 0.5
    %v171 = vmul.f32 %v163, 0.70710677
    %v172 = vmul.f32 %v166, 0.70710677
    %v173 = verf.f32.pop %v171
    %v174 = verf.f32.pop %v172
    %v175 = vadd.f32 %v173, 1.0
    %v176 = vadd.f32 %v174, 1.0
    %v177 = vmul.f32 %v169, %v175
    %v178 = vmul.f32 %v170, %v176
    %v179 = vpack.c.bf16 %v178, %v177
    %v180 = vld [vmem:[#allocation4] sm:$0xf]
    %v181 = vld [vmem:[#allocation4 + $0x4] sm:$0xf]
    %v182 = vld [vmem:[#allocation4 + $0x8] sm:$0xf]
    %v183 = vld [vmem:[#allocation4 + $0xc] sm:$0xf]
    %v184 = vld [vmem:[#allocation4 + $0x10] sm:$0xf]
    %v185 = vld [vmem:[#allocation4 + $0x14] sm:$0xf]
    %v186 = vld [vmem:[#allocation4 + $0x18] sm:$0xf]
    %v187 = vld [vmem:[#allocation4 + $0x1c] sm:$0xf]
    %v188 = vld [vmem:[#allocation4 + $0x20] sm:$0xf]
    %v189 = vld [vmem:[#allocation4 + $0x24] sm:$0xf]
    %v190 = vld [vmem:[#allocation4 + $0x28] sm:$0xf]
    %v191 = vld [vmem:[#allocation4 + $0x2c] sm:$0xf]
    %v192 = vld [vmem:[#allocation4 + $0x30] sm:$0xf]
    %v193 = vld [vmem:[#allocation4 + $0x34] sm:$0xf]
    %v194 = vld [vmem:[#allocation4 + $0x38] sm:$0xf]
    %v195 = vld [vmem:[#allocation4 + $0x3c] sm:$0xf]
    %v196 = vld [vmem:[%s4] sm:$0x1]
    %v198 = vlaneseq
    %v199 = vshrl.u32 %v198, 7
    %v200 = vsub.s32 0, %v199
    %v201 = vrot.slane %v196, %v200
    %v219 = vunpack.c.l.b16 %v180
    %v220 = vunpack.c.l.b16 %v181
    %v221 = vunpack.c.l.b16 %v182
    %v222 = vunpack.c.l.b16 %v183
    %v223 = vunpack.c.l.b16 %v184
    %v224 = vunpack.c.l.b16 %v185
    %v225 = vunpack.c.l.b16 %v186
    %v226 = vunpack.c.l.b16 %v187
    %v227 = vunpack.c.l.b16 %v188
    %v228 = vunpack.c.l.b16 %v189
    %v229 = vunpack.c.l.b16 %v190
    %v230 = vunpack.c.l.b16 %v191
    %v231 = vunpack.c.l.b16 %v192
    %v232 = vunpack.c.l.b16 %v193
    %v233 = vunpack.c.l.b16 %v194
    %v234 = vunpack.c.l.b16 %v195
    %v235 = vpack.c.b16 %v220, %v219
    %v236 = vpack.c.b16 %v222, %v221
    %v237 = vpack.c.b16 %v224, %v223
    %v238 = vpack.c.b16 %v226, %v225
    %v239 = vpack.c.b16 %v228, %v227
    %v240 = vpack.c.b16 %v230, %v229
    %v241 = vpack.c.b16 %v232, %v231
    %v242 = vpack.c.b16 %v234, %v233
    %251 = vmatprep.subr.bf16.mxu0 0
    %252 = vmatpush1.bf16.msra.mxu0 %v242
    %253 = vmatprep.subr.bf16.mxu0 0
    %254 = vmatpush1.bf16.msra.mxu0 %v241
    %255 = vmatprep.subr.bf16.mxu0 0
    %256 = vmatpush1.bf16.msra.mxu0 %v240
    %257 = vmatprep.subr.bf16.mxu0 0
    %258 = vmatpush1.bf16.msra.mxu0 %v239
    %259 = vmatprep.subr.bf16.mxu0 0
    %260 = vmatpush1.bf16.msra.mxu0 %v238
    %261 = vmatprep.subr.bf16.mxu0 0
    %262 = vmatpush1.bf16.msra.mxu0 %v237
    %263 = vmatprep.subr.bf16.mxu0 0
    %264 = vmatpush1.bf16.msra.mxu0 %v236
    %265 = vmatprep.subr.bf16.mxu0 0
    %266 = vmatpush1.bf16.msra.mxu0 %v235
    %267 = vmatprep.subr.bf16.mxu0 0
    %268 = vmatpush2.bf16.msra.mxu0 0
    %269 = vmatprep.subr.bf16.mxu0 0
    %270 = vmatpush2.bf16.msra.mxu0 0
    %271 = vmatprep.subr.bf16.mxu0 0
    %272 = vmatpush2.bf16.msra.mxu0 0
    %273 = vmatprep.subr.bf16.mxu0 0
    %274 = vmatpush2.bf16.msra.mxu0 0
    %275 = vmatprep.subr.bf16.mxu0 0
    %276 = vmatpush2.bf16.msra.mxu0 0
    %277 = vmatprep.subr.bf16.mxu0 0
    %278 = vmatpush2.bf16.msra.mxu0 0
    %279 = vmatprep.subr.bf16.mxu0 0
    %280 = vmatpush2.bf16.msra.mxu0 0
    %281 = vmatprep.subr.bf16.mxu0 0
    %282 = vmatpush2.bf16.msra.mxu0 0
    %283 = vmatprep.mubr.bf16.mxu0 0
    %284 = vmatmul.mubr.bf16.gmra.mxu0 %v179
    %v285 = vpop.f32.mrf.mxu0
    %v286 = vadd.f32 %v201, %v285
    %v287 = vpop.f32.mrf.mxu0
    %v288 = vpop.f32.mrf.mxu0
    %v289 = vadd.f32 %v201, %v288
    %v290 = vpop.f32.mrf.mxu0
    %291 = vdwg.mxu0
    %292 = vst [vmem:[%s5] sm:$0xff] %v286
    %293 = vst [vmem:[%s5 + $0x8] sm:$0xff] %v289
    // Predicated region
    $region30: #{embed_block_forward.1} parent=1 // pred_check
      _
    $region31: #{embed_block_forward.1} parent=1 // pred_check_branch
      %295 = sbr.rel (0) target = $region33
    $region32: #{embed_block_forward.1} parent=1 // pred_region
      _
    $region33: #{embed_block_forward.1} parent=1 // pred_fallthru
      _
    // Predicated region
    $region34: #{embed_block_forward.1} parent=1 // pred_check
      _
    $region35: #{embed_block_forward.1} parent=1 // pred_check_branch
      %297 = sbr.rel (0) target = $region37
    $region36: #{embed_block_forward.1} parent=1 // pred_region
      _
    $region37: #{embed_block_forward.1} parent=1 // pred_fallthru
      _
    %298 = vsyncpa [#allocation3], 1
    %299 = vsyncpa [#allocation5], 1

</llo_original>
